<compile_context>
chip_gen: v7x
topology: tpu7x:2x2x1
jax: 0.10.0
libtpu: 0.0.40
codegen_flags: <defaults>
</compile_context>

<pallas_src>
import functools

import jax
import jax.numpy as jnp
from jax.experimental import pallas as pl
from jax.experimental.pallas import tpu as pltpu


def _round_up(a, b):
    return ((a + b - 1) // b) * b


def _pick_tile_m(M, block_m, min_grid_steps=4):
    """Pick a row-tile size: multiple of 8, <= block_m, prefer an exact divisor of M,
    and small enough that the grid has >= min_grid_steps steps (v7x megacore)."""
    cap = max(8, min(block_m, _round_up(pl.cdiv(M, min_grid_steps), 8)))
    if M % 8 == 0:
        for tm in range(min(cap, M), 7, -8):
            if M % tm == 0:
                return tm, M                      # exact tiling, no padding
    tm = min(cap, _round_up(M, 8))
    return tm, _round_up(M, tm)                   # rare fallback: ragged M -> pad


def _bert_self_output_kernel(x_ref, h_ref, wt_ref, b_ref, g_ref, beta_ref, o_ref,
                             *, eps):
    # Dense: hidden_states @ W.T + b.
    # wt_ref already holds W.T ([H_in, H_out]) so this is a canonical [M,K]x[K,N]
    # MXU matmul with native-dtype (bf16) operands and f32 accumulation.
    y = jnp.dot(h_ref[...], wt_ref[...], preferred_element_type=jnp.float32)
    y = y + b_ref[...].astype(jnp.float32)

    # Dropout: inference mode (identity).
    # TODO(synk): training-mode dropout would use pltpu.prng_seed / prng_random_bits.

    # Residual add + LayerNorm over the hidden (lane) axis, f32, two-pass variance
    # (matches PyTorch LayerNorm numerics; XLU has slack next to the MXU work).
    z = x_ref[...].astype(jnp.float32) + y
    mean = jnp.mean(z, axis=-1, keepdims=True)
    c = z - mean
    var = jnp.mean(c * c, axis=-1, keepdims=True)
    norm = c * jax.lax.rsqrt(var + eps)
    out = norm * g_ref[...].astype(jnp.float32) + beta_ref[...].astype(jnp.float32)
    o_ref[...] = out.astype(o_ref.dtype)


def bert_self_output(x, hidden_states, weight, bias, gamma, beta,
                     *, eps=1e-12, block_m=512, matmul_dtype=jnp.bfloat16):
    """x, hidden_states: [B, S, H]; weight: [H, H] (PyTorch Linear layout: out x in)."""
    B, S, H = x.shape
    M = B * S

    tm, M_pad = _pick_tile_m(M, block_m)

    x2 = x.reshape(M, H)
    h2 = hidden_states.reshape(M, H).astype(matmul_dtype)
    if M_pad != M:
        # Fallback only when no multiple-of-8 tile divides M (rare for BERT shapes).
        pad = ((0, M_pad - M), (0, 0))
        x2 = jnp.pad(x2, pad)
        h2 = jnp.pad(h2, pad)

    # One-time HBM-side transpose: pass W.T so the MXU gets its [K, N] layout and
    # no per-grid-step transpose happens inside the kernel.
    wt = weight.T.astype(matmul_dtype)
    b2 = bias.reshape(1, H)
    g2 = gamma.reshape(1, H)
    beta2 = beta.reshape(1, H)

    out_dtype = x.dtype
    # TODO(synk): for H not a multiple of 128 and H != full block, lane padding would
    # need masked LN statistics (H=768/1024 BERT configs use full-H blocks: fine).

    # VMEM footprint: double-buffered x / h / out tiles + single-buffered residents.
    isz = lambda a: jnp.dtype(a.dtype).itemsize
    footprint = (2 * tm * H * (isz(x2) + isz(h2) + jnp.dtype(out_dtype).itemsize)
                 + wt.size * isz(wt)
                 + 3 * H * 4)
    vmem_limit = int(min(max(footprint + (4 << 20), 16 << 20), 48 << 20))

    kernel = functools.partial(_bert_self_output_kernel, eps=eps)
    resident = dict(pipeline_mode=pl.Buffered(1))   # DMA'd once, single buffer

    out = pl.pallas_call(
        kernel,
        out_shape=jax.ShapeDtypeStruct((M_pad, H), out_dtype),
        grid_spec=pl.GridSpec(
            grid=(M_pad // tm,),
            in_specs=[
                pl.BlockSpec((tm, H), lambda i: (i, 0)),              # x (residual)
                pl.BlockSpec((tm, H), lambda i: (i, 0)),              # hidden_states
                pl.BlockSpec((H, H), lambda i: (0, 0), **resident),   # W.T (resident)
                pl.BlockSpec((1, H), lambda i: (0, 0), **resident),   # bias
                pl.BlockSpec((1, H), lambda i: (0, 0), **resident),   # LN gamma
                pl.BlockSpec((1, H), lambda i: (0, 0), **resident),   # LN beta
            ],
            out_specs=pl.BlockSpec((tm, H), lambda i: (i, 0)),
        ),
        compiler_params=pltpu.CompilerParams(
            dimension_semantics=("parallel",),       # shard row-grid across TCs (v7x)
            vmem_limit_bytes=vmem_limit),
    )(x2, h2, wt, b2, g2, beta2)

    if M_pad != M:
        out = out[:M]
    return out.reshape(B, S, H)


if __name__ == "__main__":
    # Small BERT-like config: batch=2, seq=8, hidden=32, eps=1e-12.
    B, S, H = 2, 8, 32
    eps = 1e-12

    key = jax.random.PRNGKey(0)
    k_x, k_h, k_w, k_b, k_g, k_beta = jax.random.split(key, 6)

    x = jax.random.normal(k_x, (B, S, H), dtype=jnp.float32)
    hidden_states = jax.random.normal(k_h, (B, S, H), dtype=jnp.float32)

    # Deterministic synthetic parameters (shapes from nn.Linear(H, H) / nn.LayerNorm(H)).
    weight = jax.random.normal(k_w, (H, H), dtype=jnp.float32) * (1.0 / jnp.sqrt(H))
    bias = jax.random.normal(k_b, (H,), dtype=jnp.float32) * 0.02
    gamma = 1.0 + 0.1 * jax.random.normal(k_g, (H,), dtype=jnp.float32)
    beta = 0.1 * jax.random.normal(k_beta, (H,), dtype=jnp.float32)

    out = bert_self_output(x, hidden_states, weight, bias, gamma, beta, eps=eps)
    out = jax.block_until_ready(out)

    # Pure-JAX reference (eval-mode dropout == identity).  The kernel intentionally
    # feeds bf16 operands to the MXU (f32 accumulation), so the reference quantizes
    # the matmul operands the same way for a tight comparison.
    h_q = hidden_states.astype(jnp.bfloat16).astype(jnp.float32)
    w_q = weight.astype(jnp.bfloat16).astype(jnp.float32)
    y_ref = h_q @ w_q.T + bias
    z = x + y_ref
    mu = z.mean(-1, keepdims=True)
    var = ((z - mu) ** 2).mean(-1, keepdims=True)
    ref = (z - mu) * jax.lax.rsqrt(var + eps) * gamma + beta
    assert jnp.allclose(out, ref, atol=2e-3, rtol=2e-3), "mismatch vs reference"

    print("KERNEL_OK")
</pallas_src>

<mosaic_0001>
module attributes {stable_mosaic.version = 11 : i64} {
  func.func @_bert_self_output_kernel(%arg0: i32, %arg1: memref<8x32xf32, #tpu.memory_space<vmem>>, %arg2: memref<8x32xbf16, #tpu.memory_space<vmem>>, %arg3: memref<32x32xbf16, #tpu.memory_space<vmem>>, %arg4: memref<1x32xf32, #tpu.memory_space<vmem>>, %arg5: memref<1x32xf32, #tpu.memory_space<vmem>>, %arg6: memref<1x32xf32, #tpu.memory_space<vmem>>, %arg7: memref<8x32xf32, #tpu.memory_space<vmem>>) attributes {dimension_semantics = [#tpu.dimension_semantics<parallel>], iteration_bounds = array<i64: 2>, scalar_prefetch = 0 : i64, scratch_operands = 0 : i64, tpu.core_type = #tpu.core_type<tc>, window_params = [{transform_indices = @transform_0, window_bounds = array<i64: 8, 32>}, {transform_indices = @transform_1, window_bounds = array<i64: 8, 32>}, {pipeline_mode = #tpu.pipeline_mode<synchronous>, transform_indices = @transform_2, window_bounds = array<i64: 32, 32>}, {pipeline_mode = #tpu.pipeline_mode<synchronous>, transform_indices = @transform_3, window_bounds = array<i64: 1, 32>}, {pipeline_mode = #tpu.pipeline_mode<synchronous>, transform_indices = @transform_4, window_bounds = array<i64: 1, 32>}, {pipeline_mode = #tpu.pipeline_mode<synchronous>, transform_indices = @transform_5, window_bounds = array<i64: 1, 32>}, {transform_indices = @transform_6, window_bounds = array<i64: 8, 32>}]} {
    %c0 = arith.constant 0 : index
    %c0_0 = arith.constant 0 : index
    %0 = vector.load %arg2[%c0, %c0_0] : memref<8x32xbf16, #tpu.memory_space<vmem>>, vector<8x32xbf16>
    %c0_1 = arith.constant 0 : index
    %c0_2 = arith.constant 0 : index
    %1 = vector.load %arg3[%c0_1, %c0_2] : memref<32x32xbf16, #tpu.memory_space<vmem>>, vector<32x32xbf16>
    %cst = arith.constant dense<0.000000e+00> : vector<8x32xf32>
    %2 = tpu.matmul %0, %1, %cst {dimension_numbers = #tpu.dot_dimension_numbers<[1], [0], [0], [1], [0, 0, 1, 1], [], []>} : vector<8x32xbf16>, vector<32x32xbf16>, vector<8x32xf32> -> vector<8x32xf32>
    %c0_3 = arith.constant 0 : index
    %c0_4 = arith.constant 0 : index
    %3 = vector.load %arg4[%c0_3, %c0_4] : memref<1x32xf32, #tpu.memory_space<vmem>>, vector<1x32xf32>
    %4 = vector.broadcast %3 : vector<1x32xf32> to vector<8x32xf32>
    %5 = arith.addf %2, %4 : vector<8x32xf32>
    %c0_5 = arith.constant 0 : index
    %c0_6 = arith.constant 0 : index
    %6 = vector.load %arg1[%c0_5, %c0_6] : memref<8x32xf32, #tpu.memory_space<vmem>>, vector<8x32xf32>
    %7 = arith.addf %6, %5 : vector<8x32xf32>
    %cst_7 = arith.constant dense<0.000000e+00> : vector<8xf32>
    %8 = vector.multi_reduction <add>, %7, %cst_7 [1] : vector<8x32xf32> to vector<8xf32>
    %9 = vector.shape_cast %8 : vector<8xf32> to vector<8x1xf32>
    %cst_8 = arith.constant 3.200000e+01 : f32
    %10 = vector.broadcast %cst_8 : f32 to vector<8x1xf32>
    %11 = arith.divf %9, %10 : vector<8x1xf32>
    %12 = vector.broadcast %11 : vector<8x1xf32> to vector<8x32xf32>
    %13 = arith.subf %7, %12 : vector<8x32xf32>
    %14 = arith.mulf %13, %13 : vector<8x32xf32>
    %cst_9 = arith.constant dense<0.000000e+00> : vector<8xf32>
    %15 = vector.multi_reduction <add>, %14, %cst_9 [1] : vector<8x32xf32> to vector<8xf32>
    %16 = vector.shape_cast %15 : vector<8xf32> to vector<8x1xf32>
    %cst_10 = arith.constant 3.200000e+01 : f32
    %17 = vector.broadcast %cst_10 : f32 to vector<8x1xf32>
    %18 = arith.divf %16, %17 : vector<8x1xf32>
    %cst_11 = arith.constant 9.99999996E-13 : f32
    %19 = vector.broadcast %cst_11 : f32 to vector<8x1xf32>
    %20 = arith.addf %18, %19 : vector<8x1xf32>
    %21 = math.rsqrt %20 : vector<8x1xf32>
    %22 = vector.broadcast %21 : vector<8x1xf32> to vector<8x32xf32>
    %23 = arith.mulf %13, %22 : vector<8x32xf32>
    %c0_12 = arith.constant 0 : index
    %c0_13 = arith.constant 0 : index
    %24 = vector.load %arg5[%c0_12, %c0_13] : memref<1x32xf32, #tpu.memory_space<vmem>>, vector<1x32xf32>
    %25 = vector.broadcast %24 : vector<1x32xf32> to vector<8x32xf32>
    %26 = arith.mulf %23, %25 : vector<8x32xf32>
    %c0_14 = arith.constant 0 : index
    %c0_15 = arith.constant 0 : index
    %27 = vector.load %arg6[%c0_14, %c0_15] : memref<1x32xf32, #tpu.memory_space<vmem>>, vector<1x32xf32>
    %28 = vector.broadcast %27 : vector<1x32xf32> to vector<8x32xf32>
    %29 = arith.addf %26, %28 : vector<8x32xf32>
    %c0_16 = arith.constant 0 : index
    %c0_17 = arith.constant 0 : index
    %30 = vector.load %arg7[%c0_16, %c0_17] : memref<8x32xf32, #tpu.memory_space<vmem>>, vector<8x32xf32>
    tpu.vector_store %arg7[%c0_16, %c0_17], %29 {strides = array<i32>} : memref<8x32xf32, #tpu.memory_space<vmem>>, vector<8x32xf32>,
    return
  }
  func.func @transform_0(%arg0: i32) -> (i32, i32) {
    %c0_i32 = arith.constant 0 : i32
    %c0_i32_0 = arith.constant 0 : i32
    return %arg0, %c0_i32 : i32, i32
  }
  func.func @transform_1(%arg0: i32) -> (i32, i32) {
    %c0_i32 = arith.constant 0 : i32
    %c0_i32_0 = arith.constant 0 : i32
    return %arg0, %c0_i32 : i32, i32
  }
  func.func @transform_2(%arg0: i32) -> (i32, i32) {
    %c0_i32 = arith.constant 0 : i32
    %c0_i32_0 = arith.constant 0 : i32
    %c0_i32_1 = arith.constant 0 : i32
    return %c0_i32, %c0_i32_0 : i32, i32
  }
  func.func @transform_3(%arg0: i32) -> (i32, i32) {
    %c0_i32 = arith.constant 0 : i32
    %c0_i32_0 = arith.constant 0 : i32
    %c0_i32_1 = arith.constant 0 : i32
    return %c0_i32, %c0_i32_0 : i32, i32
  }
  func.func @transform_4(%arg0: i32) -> (i32, i32) {
    %c0_i32 = arith.constant 0 : i32
    %c0_i32_0 = arith.constant 0 : i32
    %c0_i32_1 = arith.constant 0 : i32
    return %c0_i32, %c0_i32_0 : i32, i32
  }
  func.func @transform_5(%arg0: i32) -> (i32, i32) {
    %c0_i32 = arith.constant 0 : i32
    %c0_i32_0 = arith.constant 0 : i32
    %c0_i32_1 = arith.constant 0 : i32
    return %c0_i32, %c0_i32_0 : i32, i32
  }
  func.func @transform_6(%arg0: i32) -> (i32, i32) {
    %c0_i32 = arith.constant 0 : i32
    %c0_i32_0 = arith.constant 0 : i32
    return %arg0, %c0_i32 : i32, i32
  }
}

</mosaic_0001>

<llo_original>
// kernel: tpu_custom_call.1
$region0: #{tpu_custom_call.1}
  #allocation0 [shape = 'u32[]', space=smem, size = 0x4, offset = 0x4, fixed_abs, tag = 'smem constant byte address 0x4 - core index']
  #allocation1 [shape = 'u32[144,128]{1,0:T(1,128)}', space=vmem, size = 0x12000, scoped, tag = 'internal scratch']
  %s0 = inlined_call_operand.hbm [shape: f32[16,32], index: 0, kind: input, shape index: {}]
  %s1 = inlined_call_operand.hbm [shape: bf16[16,32], index: 1, kind: input, shape index: {}]
  %s2 = inlined_call_operand.hbm [shape: bf16[32,32], index: 2, kind: input, shape index: {}]
  %s3 = inlined_call_operand.vmem [shape: f32[1,32], index: 3, kind: input, shape index: {}]
  %s4 = inlined_call_operand.vmem [shape: f32[1,32], index: 4, kind: input, shape index: {}]
  %s5 = inlined_call_operand.vmem [shape: f32[1,32], index: 5, kind: input, shape index: {}]
  %s6 = inlined_call_operand.hbm [shape: f32[16,32], index: 6, kind: output, shape index: {}]
  %s7 = sld [smem:[#allocation0]]
  $region69: #{tpu_custom_call.1} parent=0
    _
  %s9 = ssub.s32 1, %s7
  %s10 = scalar_select 0, %s9, %s7
  $region1: #{tpu_custom_call.1} parent=0
    #allocation2 [shape = 'u8[8192]{0}', space=vmem, size = 0x2000, scoped, tag = 'input window, operand 0']
    #allocation3 [shape = 's32[2]{0}', space=sflag, size = 0x8, scoped, tag = 'scoped memory for tpu_custom_call.1']
    #allocation4 [shape = 's32[2]{0}', space=sflag, size = 0x8, scoped, tag = 'scoped memory for tpu_custom_call.1']
    #allocation5 [shape = 'u8[4096]{0}', space=vmem, size = 0x1000, scoped, tag = 'input window, operand 1']
    #allocation6 [shape = 's32[2]{0}', space=sflag, size = 0x8, scoped, tag = 'scoped memory for tpu_custom_call.1']
    #allocation7 [shape = 'u8[8192]{0}', space=vmem, size = 0x2000, scoped, tag = 'input window, operand 2, single buffered']
    #allocation8 [shape = 'u8[8192]{0}', space=vmem, size = 0x2000, scoped, tag = 'output window, operand 0']
    %11 = vsyncpa [#allocation3], 0
    %s12 = scalar_lea.sflag [#allocation3], 1
    %13 = vsyncpa %s12, 0
    %14 = vsyncpa [#allocation6], 0
    %s15 = scalar_lea.sflag [#allocation6], 1
    %16 = vsyncpa %s15, 0
    %17 = vsyncpa [#allocation4], 0
    %s18 = scalar_lea.sflag [#allocation4], 1
    %19 = vsyncpa %s18, 0
    loop: start=0, step=1, limit=4
    $region2: #{tpu_custom_call.1} parent=1 // loop_pre_header
      _
    $region3: #{tpu_custom_call.1} parent=1 // loop_header
      %s21 = sphi 0, %s25
      %p22 = scmp.ge.s32.totalorder %s21, 4
      %s31 = sphi 0, %s33
      %s34 = sphi 0, %s31
      %s35 = sphi 0, %s34
      %s51 = sphi 0, %s35
      %s57 = sphi 0, %s59
      %s60 = sphi 0, %s57
      %s61 = sphi 0, %s60
      %s77 = sphi 0, %s61
      %s81 = sphi 0, %s81
      %s83 = sphi 0, %s81
      %s84 = sphi 0, %s83
      %s98 = sphi 0, %s84
      %s102 = sphi 0, %s102
      %s104 = sphi 0, %s102
      %s105 = sphi 0, %s104
      %s119 = sphi 0, %s105
      %s123 = sphi 0, %s123
      %s125 = sphi 0, %s123
      %s126 = sphi 0, %s125
      %s140 = sphi 0, %s126
      %s144 = sphi 0, %s144
      %s146 = sphi 0, %s144
      %s147 = sphi 0, %s146
      %s161 = sphi 0, %s147
      %s167 = sphi 0, %s169
      %s170 = sphi 0, %s167
      %s171 = sphi 0, %s170
      %s187 = sphi 0, %s171
    $region4: #{tpu_custom_call.1} parent=1 // loop_header_branch
      %24 = sbr.rel (%p22) target = $region8
    $region5: #{tpu_custom_call.1} parent=1 // loop_body
      %s26 = ssub.s32 %s21, 1
      %s27 = ssub.s32 %s21, 2
      %s28 = sadd.s32 %s21, 1
      %s29 = ssub.s32 %s21, %s28
      %p30 = scmp.eq.s32.totalorder %s29, 0
      %s32 = sadd.s32 %s31, 1
      %s33 = scalar_select %p30, %s31, %s32
      %p36 = pneg %p30
      %p37 = scmp.eq.s32.totalorder %s21, 1
      %p38 = por %p36, %p37
      %p39 = scmp.ne.s32.totalorder %s31, %s34
      %p40 = scmp.eq.s32.totalorder %s21, 0
      %p41 = por %p39, %p40
      %p42 = scmp.ne.s32.totalorder %s31, %s34
      %p43 = scmp.eq.s32.totalorder %s26, 1
      %p44 = por %p42, %p43
      %p45 = scmp.ne.s32.totalorder %s34, %s35
      %p46 = scmp.eq.s32.totalorder %s26, 0
      %p47 = por %p45, %p46
      %p48 = scmp.ne.s32.totalorder %s34, %s35
      %p49 = scmp.eq.s32.totalorder %s27, 1
      %p50 = por %p48, %p49
      %p52 = scmp.ne.s32.totalorder %s35, %s51
      %p53 = scmp.eq.s32.totalorder %s27, 0
      %p54 = por %p52, %p53
      %s55 = ssub.s32 %s21, %s28
      %p56 = scmp.eq.s32.totalorder %s55, 0
      %s58 = sadd.s32 %s57, 1
      %s59 = scalar_select %p56, %s57, %s58
      %p62 = pneg %p56
      %p63 = scmp.eq.s32.totalorder %s21, 1
      %p64 = por %p62, %p63
      %p65 = scmp.ne.s32.totalorder %s57, %s60
      %p66 = scmp.eq.s32.totalorder %s21, 0
      %p67 = por %p65, %p66
      %p68 = scmp.ne.s32.totalorder %s57, %s60
      %p69 = scmp.eq.s32.totalorder %s26, 1
      %p70 = por %p68, %p69
      %p71 = scmp.ne.s32.totalorder %s60, %s61
      %p72 = scmp.eq.s32.totalorder %s26, 0
      %p73 = por %p71, %p72
      %p74 = scmp.ne.s32.totalorder %s60, %s61
      %p75 = scmp.eq.s32.totalorder %s27, 1
      %p76 = por %p74, %p75
      %p78 = scmp.ne.s32.totalorder %s61, %s77
      %p79 = scmp.eq.s32.totalorder %s27, 0
      %p80 = por %p78, %p79
      %s82 = sadd.s32 %s81, 1
      %p85 = scmp.eq.s32.totalorder %s21, 1
      %p86 = scmp.ne.s32.totalorder %s81, %s83
      %p87 = scmp.eq.s32.totalorder %s21, 0
      %p88 = por %p86, %p87
      %p89 = scmp.ne.s32.totalorder %s81, %s83
      %p90 = scmp.eq.s32.totalorder %s26, 1
      %p91 = por %p89, %p90
      %p92 = scmp.ne.s32.totalorder %s83, %s84
      %p93 = scmp.eq.s32.totalorder %s26, 0
      %p94 = por %p92, %p93
      %p95 = scmp.ne.s32.totalorder %s83, %s84
      %p96 = scmp.eq.s32.totalorder %s27, 1
      %p97 = por %p95, %p96
      %p99 = scmp.ne.s32.totalorder %s84, %s98
      %p100 = scmp.eq.s32.totalorder %s27, 0
      %p101 = por %p99, %p100
      %s103 = sadd.s32 %s102, 1
      %p106 = scmp.eq.s32.totalorder %s21, 1
      %p107 = scmp.ne.s32.totalorder %s102, %s104
      %p108 = scmp.eq.s32.totalorder %s21, 0
      %p109 = por %p107, %p108
      %p110 = scmp.ne.s32.totalorder %s102, %s104
      %p111 = scmp.eq.s32.totalorder %s26, 1
      %p112 = por %p110, %p111
      %p113 = scmp.ne.s32.totalorder %s104, %s105
      %p114 = scmp.eq.s32.totalorder %s26, 0
      %p115 = por %p113, %p114
      %p116 = scmp.ne.s32.totalorder %s104, %s105
      %p117 = scmp.eq.s32.totalorder %s27, 1
      %p118 = por %p116, %p117
      %p120 = scmp.ne.s32.totalorder %s105, %s119
      %p121 = scmp.eq.s32.totalorder %s27, 0
      %p122 = por %p120, %p121
      %s124 = sadd.s32 %s123, 1
      %p127 = scmp.eq.s32.totalorder %s21, 1
      %p128 = scmp.ne.s32.totalorder %s123, %s125
      %p129 = scmp.eq.s32.totalorder %s21, 0
      %p130 = por %p128, %p129
      %p131 = scmp.ne.s32.totalorder %s123, %s125
      %p132 = scmp.eq.s32.totalorder %s26, 1
      %p133 = por %p131, %p132
      %p134 = scmp.ne.s32.totalorder %s125, %s126
      %p135 = scmp.eq.s32.totalorder %s26, 0
      %p136 = por %p134, %p135
      %p137 = scmp.ne.s32.totalorder %s125, %s126
      %p138 = scmp.eq.s32.totalorder %s27, 1
      %p139 = por %p137, %p138
      %p141 = scmp.ne.s32.totalorder %s126, %s140
      %p142 = scmp.eq.s32.totalorder %s27, 0
      %p143 = por %p141, %p142
      %s145 = sadd.s32 %s144, 1
      %p148 = scmp.eq.s32.totalorder %s21, 1
      %p149 = scmp.ne.s32.totalorder %s144, %s146
      %p150 = scmp.eq.s32.totalorder %s21, 0
      %p151 = por %p149, %p150
      %p152 = scmp.ne.s32.totalorder %s144, %s146
      %p153 = scmp.eq.s32.totalorder %s26, 1
      %p154 = por %p152, %p153
      %p155 = scmp.ne.s32.totalorder %s146, %s147
      %p156 = scmp.eq.s32.totalorder %s26, 0
      %p157 = por %p155, %p156
      %p158 = scmp.ne.s32.totalorder %s146, %s147
      %p159 = scmp.eq.s32.totalorder %s27, 1
      %p160 = por %p158, %p159
      %p162 = scmp.ne.s32.totalorder %s147, %s161
      %p163 = scmp.eq.s32.totalorder %s27, 0
      %p164 = por %p162, %p163
      %s165 = ssub.s32 %s21, %s28
      %p166 = scmp.eq.s32.totalorder %s165, 0
      %s168 = sadd.s32 %s167, 1
      %s169 = scalar_select %p166, %s167, %s168
      %p172 = pneg %p166
      %p173 = scmp.eq.s32.totalorder %s21, 1
      %p174 = por %p172, %p173
      %p175 = scmp.ne.s32.totalorder %s167, %s170
      %p176 = scmp.eq.s32.totalorder %s21, 0
      %p177 = por %p175, %p176
      %p178 = scmp.ne.s32.totalorder %s167, %s170
      %p179 = scmp.eq.s32.totalorder %s26, 1
      %p180 = por %p178, %p179
      %p181 = scmp.ne.s32.totalorder %s170, %s171
      %p182 = scmp.eq.s32.totalorder %s26, 0
      %p183 = por %p181, %p182
      %p184 = scmp.ne.s32.totalorder %s170, %s171
      %p185 = scmp.eq.s32.totalorder %s27, 1
      %p186 = por %p184, %p185
      %p188 = scmp.ne.s32.totalorder %s171, %s187
      %p189 = scmp.eq.s32.totalorder %s27, 0
      %p190 = por %p188, %p189
      %p191 = scmp.le.s32.totalorder 1, %s21
      %p192 = scmp.lt.s32.totalorder %s21, 3
      %p193 = pnand %p191, %p192
      %p194 = pneg %p193
      // Predicated region
      $region9: #{tpu_custom_call.1} parent=5 // pred_check
        _
      $region10: #{tpu_custom_call.1} parent=5 // pred_check_branch
        %196 = sbr.rel (%p193) target = $region12
      $region11: #{tpu_custom_call.1} parent=5 // pred_region
        %s197 = ssub.s32 %s21, 1
        // Predicated region
        $region13: #{tpu_custom_call.1} parent=11 // pred_check
          %p198 = pneg %p94
        $region14: #{tpu_custom_call.1} parent=11 // pred_check_branch
          %200 = sbr.rel (%p198) target = $region16
        $region15: #{tpu_custom_call.1} parent=11 // pred_region
          %s202 = ssub.s32 256, 256
          %203 = vsyncadd [#allocation6], %s202
          %s204 = sshll.u32 [#allocation7], 4
          %s205 = int_to_ptr.vmem [resolvable:$true] %s204
          %210 = dma.hbm_to_vmem [thread:$0]  %s2, 256, %s205, [#allocation6], 64, 64, 4
        $region16: #{tpu_custom_call.1} parent=11 // pred_fallthru
          _
        // Predicated region
        $region17: #{tpu_custom_call.1} parent=11 // pred_check
          %p211 = pneg %p115
        $region18: #{tpu_custom_call.1} parent=11 // pred_check_branch
          %213 = sbr.rel (%p211) target = $region20
        $region19: #{tpu_custom_call.1} parent=11 // pred_region
          _
        $region20: #{tpu_custom_call.1} parent=11 // pred_fallthru
          _
        // Predicated region
        $region21: #{tpu_custom_call.1} parent=11 // pred_check
          %p214 = pneg %p136
        $region22: #{tpu_custom_call.1} parent=11 // pred_check_branch
          %216 = sbr.rel (%p214) target = $region24
        $region23: #{tpu_custom_call.1} parent=11 // pred_region
          _
        $region24: #{tpu_custom_call.1} parent=11 // pred_fallthru
          _
        // Predicated region
        $region25: #{tpu_custom_call.1} parent=11 // pred_check
          %p217 = pneg %p157
        $region26: #{tpu_custom_call.1} parent=11 // pred_check_branch
          %219 = sbr.rel (%p217) target = $region28
        $region27: #{tpu_custom_call.1} parent=11 // pred_region
          _
        $region28: #{tpu_custom_call.1} parent=11 // pred_fallthru
          _
      $region12: #{tpu_custom_call.1} parent=5 // pred_fallthru
        _
      %p220 = scmp.lt.s32.totalorder %s21, 2
      // Predicated region
      $region29: #{tpu_custom_call.1} parent=5 // pred_check
        %p221 = pneg %p220
      $region30: #{tpu_custom_call.1} parent=5 // pred_check_branch
        %223 = sbr.rel (%p221) target = $region32
      $region31: #{tpu_custom_call.1} parent=5 // pred_region
        // Predicated region
        $region33: #{tpu_custom_call.1} parent=31 // pred_check
          %p224 = pneg %p41
        $region34: #{tpu_custom_call.1} parent=31 // pred_check_branch
          %226 = sbr.rel (%p224) target = $region36
        $region35: #{tpu_custom_call.1} parent=31 // pred_region
          %s227 = sand.u32 %s31, 1
          %s228 = scalar_lea.sflag [#allocation3], %s227
          %s229 = sand.u32 %s31, 1
          %s230 = smul.addr %s229, 8
          %s231 = scalar_lea.vmem [#allocation2], %s230
          %s233 = ssub.s32 128, 128
          %234 = vsyncadd %s228, %s233
          %s235 = smul.addr %s21, 128
          %s236 = scalar_lea.hbm %s0, %s235
          %s238 = sshll.u32 %s231, 4
          %s239 = int_to_ptr.vmem [resolvable:$true] %s238
          %241 = dma.hbm_to_vmem [thread:$0]  %s236, 128, %s239, %s228
        $region36: #{tpu_custom_call.1} parent=31 // pred_fallthru
          _
        // Predicated region
        $region37: #{tpu_custom_call.1} parent=31 // pred_check
          %p242 = pneg %p67
        $region38: #{tpu_custom_call.1} parent=31 // pred_check_branch
          %244 = sbr.rel (%p242) target = $region40
        $region39: #{tpu_custom_call.1} parent=31 // pred_region
          %s245 = sand.u32 %s21, 1
          %s246 = scalar_lea.sflag [#allocation6], %s245
          %s247 = sand.u32 %s57, 1
          %s248 = smul.addr %s247, 4
          %s249 = scalar_lea.vmem [#allocation5], %s248
          %s251 = ssub.s32 64, 64
          %252 = vsyncadd %s246, %s251
          %s253 = smul.addr %s21, 64
          %s254 = scalar_lea.hbm %s1, %s253
          %s256 = sshll.u32 %s249, 4
          %s257 = int_to_ptr.vmem [resolvable:$true] %s256
          %259 = dma.hbm_to_vmem [thread:$0]  %s254, 64, %s257, %s246
        $region40: #{tpu_custom_call.1} parent=31 // pred_fallthru
          _
      $region32: #{tpu_custom_call.1} parent=5 // pred_fallthru
        _
      %p260 = scmp.le.s32.totalorder 1, %s21
      %p261 = scmp.lt.s32.totalorder %s21, 3
      %p262 = pnand %p260, %p261
      %p263 = pneg %p262
      // Predicated region
      $region41: #{tpu_custom_call.1} parent=5 // pred_check
        _
      $region42: #{tpu_custom_call.1} parent=5 // pred_check_branch
        %265 = sbr.rel (%p262) target = $region44
      $region43: #{tpu_custom_call.1} parent=5 // pred_region
        %s266 = ssub.s32 %s21, 1
        %s267 = sand.u32 %s34, 1
        %s268 = scalar_lea.sflag [#allocation3], %s267
        %s269 = sand.u32 %s34, 1
        %s270 = smul.addr %s269, 8
        %s271 = scalar_lea.vmem [#allocation2], %s270
        // Predicated region
        $region45: #{tpu_custom_call.1} parent=43 // pred_check
          %p272 = pneg %p47
        $region46: #{tpu_custom_call.1} parent=43 // pred_check_branch
          %274 = sbr.rel (%p272) target = $region48
        $region47: #{tpu_custom_call.1} parent=43 // pred_region
          %275 = dma.done %s268, 128
        $region48: #{tpu_custom_call.1} parent=43 // pred_fallthru
          _
        %s276 = sand.u32 %s26, 1
        %s277 = scalar_lea.sflag [#allocation6], %s276
        %s278 = sand.u32 %s60, 1
        %s279 = smul.addr %s278, 4
        %s280 = scalar_lea.vmem [#allocation5], %s279
        // Predicated region
        $region49: #{tpu_custom_call.1} parent=43 // pred_check
          %p281 = pneg %p73
        $region50: #{tpu_custom_call.1} parent=43 // pred_check_branch
          %283 = sbr.rel (%p281) target = $region52
        $region51: #{tpu_custom_call.1} parent=43 // pred_region
          %284 = dma.done %s277, 64
        $region52: #{tpu_custom_call.1} parent=43 // pred_fallthru
          _
        // Predicated region
        $region53: #{tpu_custom_call.1} parent=43 // pred_check
          %p285 = pneg %p94
        $region54: #{tpu_custom_call.1} parent=43 // pred_check_branch
          %287 = sbr.rel (%p285) target = $region56
        $region55: #{tpu_custom_call.1} parent=43 // pred_region
          %288 = dma.done [#allocation6], 256
        $region56: #{tpu_custom_call.1} parent=43 // pred_fallthru
          _
        %s289 = sand.u32 %s34, 1
        %s290 = scalar_lea.sflag [#allocation3], %s289
        %s291 = sand.u32 %s34, 1
        %s292 = smul.addr %s291, 8
        %s293 = scalar_lea.vmem [#allocation2], %s292
        %p294 = pneg %p47
        %p295 = pneg %p44
        %s296 = sand.u32 %s26, 1
        %s297 = scalar_lea.sflag [#allocation6], %s296
        %s298 = sand.u32 %s60, 1
        %s299 = smul.addr %s298, 4
        %s300 = scalar_lea.vmem [#allocation5], %s299
        %p301 = pneg %p73
        %p302 = pneg %p70
        %p303 = pneg %p94
        %p304 = pneg %p91
        %p305 = pneg %p115
        %p306 = pneg %p112
        %p307 = pneg %p136
        %p308 = pneg %p133
        %p309 = pneg %p157
        %p310 = pneg %p154
        %p311 = pneg %p183
        %p312 = pneg %p180
        %s313 = sand.u32 %s170, 1
        %s314 = scalar_lea.sflag [#allocation4], %s313
        %s315 = sand.u32 %s170, 1
        %s316 = smul.addr %s315, 8
        %s317 = scalar_lea.vmem [#allocation8], %s316
        %v319 = vld [vmem:[%s280] sm:$0xf]
        %v320 = vld [vmem:[#allocation7] sm:$0xf]
        %v321 = vld [vmem:[#allocation7 + $0x4] sm:$0xf]
        %v322 = vld [vmem:[#allocation7 + $0x8] sm:$0xf]
        %v323 = vld [vmem:[#allocation7 + $0xc] sm:$0xf]
        %v324 = vld [vmem:[%s3] sm:$0x1]
        %v326 = vlaneseq
        %v327 = vshrl.u32 %v326, 7
        %v328 = vsub.s32 0, %v327
        %v329 = vrot.slane %v324, %v328
        %v335 = vunpack.c.l.b16 %v320
        %v336 = vunpack.c.l.b16 %v321
        %v337 = vunpack.c.l.b16 %v322
        %v338 = vunpack.c.l.b16 %v323
        %v339 = vpack.c.b16 %v336, %v335
        %v340 = vpack.c.b16 %v338, %v337
        %vm343 = vcmask 261120
        %v345 = vsel %vm343, %v319, 0
        %347 = vmatprep.subr.bf16.mxu0 0
        %348 = vmatpush1.bf16.msra.mxu0 %v339
        %349 = vmatprep.subr.bf16.mxu0 0
        %350 = vmatpush1.bf16.msra.mxu0 %v340
        %351 = vmatprep.subr.bf16.mxu0 0
        %352 = vmatpush1.bf16.msra.mxu0 0
        %353 = vmatprep.subr.bf16.mxu0 0
        %354 = vmatpush1.bf16.msra.mxu0 0
        %355 = vmatprep.subr.bf16.mxu0 0
        %356 = vmatpush1.bf16.msra.mxu0 0
        %357 = vmatprep.subr.bf16.mxu0 0
        %358 = vmatpush1.bf16.msra.mxu0 0
        %359 = vmatprep.subr.bf16.mxu0 0
        %360 = vmatpush1.bf16.msra.mxu0 0
        %361 = vmatprep.subr.bf16.mxu0 0
        %362 = vmatpush1.bf16.msra.mxu0 0
        %363 = vmatprep.subr.bf16.mxu0 0
        %364 = vmatpush1.bf16.msra.mxu0 0
        %365 = vmatprep.subr.bf16.mxu0 0
        %366 = vmatpush1.bf16.msra.mxu0 0
        %367 = vmatprep.subr.bf16.mxu0 0
        %368 = vmatpush1.bf16.msra.mxu0 0
        %369 = vmatprep.subr.bf16.mxu0 0
        %370 = vmatpush1.bf16.msra.mxu0 0
        %371 = vmatprep.subr.bf16.mxu0 0
        %372 = vmatpush1.bf16.msra.mxu0 0
        %373 = vmatprep.subr.bf16.mxu0 0
        %374 = vmatpush1.bf16.msra.mxu0 0
        %375 = vmatprep.subr.bf16.mxu0 0
        %376 = vmatpush1.bf16.msra.mxu0 0
        %377 = vmatprep.subr.bf16.mxu0 0
        %378 = vmatpush1.bf16.msra.mxu0 0
        %379 = vmatprep.mubr.bf16.mxu0 0
        %380 = vmatmul.mubr.bf16.gmra.mrb[0].mxu0 %v345
        %v381 = vpop.f32.mrb[0].mxu0
        %v382 = vadd.f32 %v329, %v381
        %v383 = vpop.f32.mrb[0].mxu0
        %v384 = vpop.f32.mrb[0].mxu0
        %v385 = vpop.f32.mrb[0].mxu0
        %386 = vdwg.mxu0
        %v387 = vld [vmem:[%s271] sm:$0xff]
        %v388 = vadd.f32 %v387, %v382
        %v389 = vsel %vm343, %v388, 0.0
        %390 = vadd.xlane.f32.xlu0 %v389
        %v391 = vpop.xlane.xlu0 %390
        %v392 = vrcp.pop 32.0
        %v393 = vmul.f32 %v391, %v392
        %v394 = vsub.f32 %v388, %v393
        %v395 = vmul.f32 %v394, %v394
        %v396 = vsel %vm343, %v395, 0.0
        %397 = vadd.xlane.f32.xlu0 %v396
        %v398 = vpop.xlane.xlu0 %397
        %v399 = vmul.f32 %v398, %v392
        %v400 = vadd.f32 %v399, 1e-12
        %v401 = vrsqrt.pop %v400
        %v402 = vmul.f32 %v394, %v401
        %v403 = vld [vmem:[%s4] sm:$0x1]
        %v405 = vlaneseq
        %v406 = vshrl.u32 %v405, 7
        %v407 = vsub.s32 0, %v406
        %v408 = vrot.slane %v403, %v407
        %v410 = vmul.f32 %v402, %v408
        %v411 = vld [vmem:[%s5] sm:$0x1]
        %v413 = vlaneseq
        %v414 = vshrl.u32 %v413, 7
        %v415 = vsub.s32 0, %v414
        %v416 = vrot.slane %v411, %v415
        %v418 = vadd.f32 %v410, %v416
        %419 = vst.msk [vmem:[%s317] sm:$0xff] %vm343, %v418
        %s420 = sand.u32 %s170, 1
        %s421 = scalar_lea.sflag [#allocation4], %s420
        %s422 = sand.u32 %s170, 1
        %s423 = smul.addr %s422, 8
        %s424 = scalar_lea.vmem [#allocation8], %s423
        // Predicated region
        $region57: #{tpu_custom_call.1} parent=43 // pred_check
          %p425 = pneg %p180
        $region58: #{tpu_custom_call.1} parent=43 // pred_check_branch
          %427 = sbr.rel (%p425) target = $region60
        $region59: #{tpu_custom_call.1} parent=43 // pred_region
          %s429 = ssub.s32 128, 128
          %430 = vsyncadd %s421, %s429
          %s431 = smul.addr %s26, 128
          %s432 = scalar_lea.hbm %s6, %s431
          %s434 = sshll.u32 %s424, 4
          %s435 = int_to_ptr.vmem [resolvable:$true] %s434
          %437 = dma.vmem_to_hbm [thread:$0]  %s435, 128, %s432, %s421
        $region60: #{tpu_custom_call.1} parent=43 // pred_fallthru
          _
      $region44: #{tpu_custom_call.1} parent=5 // pred_fallthru
        _
      %p438 = scmp.le.s32.totalorder 2, %s21
      // Predicated region
      $region61: #{tpu_custom_call.1} parent=5 // pred_check
        %p439 = pneg %p438
      $region62: #{tpu_custom_call.1} parent=5 // pred_check_branch
        %441 = sbr.rel (%p439) target = $region64
      $region63: #{tpu_custom_call.1} parent=5 // pred_region
        %s442 = ssub.s32 %s21, 2
        // Predicated region
        $region65: #{tpu_custom_call.1} parent=63 // pred_check
          %p443 = pneg %p186
        $region66: #{tpu_custom_call.1} parent=63 // pred_check_branch
          %445 = sbr.rel (%p443) target = $region68
        $region67: #{tpu_custom_call.1} parent=63 // pred_region
          %s446 = sand.u32 %s171, 1
          %s447 = scalar_lea.sflag [#allocation4], %s446
          %s448 = sand.u32 %s171, 1
          %s449 = smul.addr %s448, 8
          %s450 = scalar_lea.vmem [#allocation8], %s449
          %451 = dma.done %s447, 128
        $region68: #{tpu_custom_call.1} parent=63 // pred_fallthru
          _
      $region64: #{tpu_custom_call.1} parent=5 // pred_fallthru
        _
    $region6: #{tpu_custom_call.1} parent=1 // loop_footer
      %s25 = sadd.s32 1, %s21
    $region7: #{tpu_custom_call.1} parent=1 // loop_footer_branch
      %20 = sbr.rel target = $region3
    $region8: #{tpu_custom_call.1} parent=1 // loop_exit
      _
    %452 = vsyncpa [#allocation3], 1
    %s453 = scalar_lea.sflag [#allocation3], 1
    %454 = vsyncpa %s453, 1
    %455 = vsyncpa [#allocation6], 1
    %s456 = scalar_lea.sflag [#allocation6], 1
    %457 = vsyncpa %s456, 1
    %458 = vsyncpa [#allocation4], 1
    %s459 = scalar_lea.sflag [#allocation4], 1
    %460 = vsyncpa %s459, 1

</llo_original>
